<compile_context>
chip_gen: v6e
topology: v6e:2x2x1
jax: 0.10.0
libtpu: 0.0.40
codegen_flags: <defaults>
</compile_context>

<pallas_src>
import functools

import jax
import jax.numpy as jnp
from jax import lax
from jax.experimental import pallas as pl
from jax.experimental.pallas import tpu as pltpu


def _layer_head_kernel(x_ref, w_ref, o_ref, k_ref, *, H, W):
    # x_ref: (8, L)    L = B*H*W; channels on sublanes, (image, pixel) on lanes
    # w_ref: (8, 128)  packed constants (rows 0..3 used):
    #                    [:, 0:72] BN-folded 3x3 conv-transpose taps
    #                    [:, 72]   BN-folded conv bias
    #                    [:, 73]   1x1 conv-transpose weights
    #                    [:, 74]   final bias
    # o_ref: (1, L)
    # k_ref: (72, L)   im2col scratch
    HW = H * W
    L = x_ref.shape[1]

    x = x_ref[...]                                         # (8, L) f32

    # Per-pixel position within its own image (edge masks).  Any roll that
    # crosses an image (or slab) boundary is out-of-image and gets masked.
    p = lax.broadcasted_iota(jnp.int32, (1, L), 1)
    if (HW & (HW - 1)) == 0:
        q = jnp.bitwise_and(p, HW - 1)
    else:
        q = p % HW                                         # not exercised at 16x16
    if (W & (W - 1)) == 0:
        col = jnp.bitwise_and(q, W - 1)
    else:
        col = q % W
    not_top = q >= W                 # row > 0
    not_bot = q < (H - 1) * W        # row < H-1
    not_left = col > 0               # col > 0
    not_right = col < (W - 1)        # col < W-1

    # im2col: 9 lane-rolled, edge-masked views, stored with aligned 8-sublane
    # writes.  K[(di*3+dj)*8 + ci, b*HW + i*W + j] = x[ci, b, i+di-1, j+dj-1].
    for di in range(3):
        for dj in range(3):
            off = (di - 1) * W + (dj - 1)
            t = x if off == 0 else pltpu.roll(x, shift=(-off) % L, axis=1)
            mask = None
            if di == 0:
                mask = not_top
            elif di == 2:
                mask = not_bot
            if dj == 0:
                mask = not_left if mask is None else jnp.logical_and(mask, not_left)
            elif dj == 2:
                mask = not_right if mask is None else jnp.logical_and(mask, not_right)
            if mask is not None:
                t = jnp.where(mask, t, 0.0)
            r0 = (di * 3 + dj) * 8
            k_ref[r0:r0 + 8, :] = t

    # ConvTranspose2d(8->4, k3, s1, p1) + eval-mode BatchNorm2d folded:
    # one fused MXU dot, bf16 operands, f32 accumulation.
    # TODO(synk): training-mode BatchNorm (batch statistics over N*H*W) not
    #             implemented; eval/inference running-stats semantics used.
    acc = jnp.dot(w_ref[0:4, 0:72].astype(jnp.bfloat16),
                  k_ref[...].astype(jnp.bfloat16),
                  preferred_element_type=jnp.float32)       # (4, L)
    acc = acc + w_ref[0:4, 72:73]                           # folded bias

    # LeakyReLU(0.2)
    acc = jnp.where(acc >= 0.0, acc, 0.2 * acc)

    # ConvTranspose2d(4->1, k1): 4-term weighted sum on the VPU, bias, ReLU.
    out = jnp.sum(acc * w_ref[0:4, 73:74], axis=0, keepdims=True)   # (1, L)
    out = jnp.maximum(out + w_ref[0:1, 74:75], 0.0)
    o_ref[...] = out


def _num_grid_steps(n_images, lanes_per_image):
    """One step on single-TC chips (v5e/v6e); two on v7x (2 TensorCores)."""
    num_tc = 1
    try:
        kind = jax.devices()[0].device_kind.lower()
        if "v7" in kind or "7x" in kind:
            num_tc = 2
    except Exception:
        pass
    steps = max(1, min(n_images, num_tc))
    # (8,128) rule: a non-full lane block must be a multiple of 128 lanes.
    while steps > 1 and ((-(-n_images // steps)) * lanes_per_image) % 128 != 0:
        steps -= 1
    return steps


def layer_head_forward(x_nchw, params):
    """Forward pass matching LayerHead (eval-mode BN). x_nchw: (N, 8, H, W) f32."""
    N, Cin, H, W = x_nchw.shape
    assert Cin == 8, "LayerHead expects 8 input channels"
    HW = H * W

    num_steps = _num_grid_steps(N, HW)
    B = -(-N // num_steps)           # images per grid step
    N_pad = B * num_steps
    L = B * HW

    x = x_nchw.astype(jnp.float32)
    if N_pad != N:
        x = jnp.pad(x, ((0, N_pad - N), (0, 0), (0, 0), (0, 0)))

    # Layout plumbing in the wrapper (tiny): lane-dense (8, N*HW) slab.
    x_slab = jnp.transpose(x, (1, 0, 2, 3)).reshape(Cin, N_pad * HW)

    w1_t = params["w1"]          # (8, 4, 3, 3) torch ConvTranspose2d (in,out,kh,kw)
    b1 = params["b1"]            # (4,)
    gamma = params["bn_gamma"]   # (4,)
    beta = params["bn_beta"]     # (4,)
    rmean = params["bn_mean"]    # (4,)
    rvar = params["bn_var"]      # (4,)
    eps = 1e-5
    w2_t = params["w2"]          # (4, 1, 1, 1)
    b2 = params["b2"]            # (1,)

    # ConvTranspose2d(s=1,p=1) == correlation with the spatially flipped kernel.
    scale = gamma / jnp.sqrt(rvar + eps)                            # (4,)
    bias_f = (b1 - rmean) * scale + beta                            # folded bias
    w1_corr = jnp.transpose(jnp.flip(w1_t, (2, 3)), (2, 3, 0, 1))   # (3,3,8,4)
    w1_corr = w1_corr * scale[None, None, None, :]                  # fold BN scale
    w1m = jnp.transpose(w1_corr, (3, 0, 1, 2)).reshape(4, 72)       # (co, (di*3+dj)*8+ci)
    w2 = w2_t[:, 0, 0, 0]                                           # (4,)

    wpack = jnp.zeros((8, 128), jnp.float32)                        # one full vreg tile
    wpack = wpack.at[0:4, 0:72].set(w1m)
    wpack = wpack.at[0:4, 72].set(bias_f)
    wpack = wpack.at[0:4, 73].set(w2)
    wpack = wpack.at[0:4, 74].set(b2[0])

    kernel = functools.partial(_layer_head_kernel, H=H, W=W)

    out_slab = pl.pallas_call(
        kernel,
        out_shape=jax.ShapeDtypeStruct((1, N_pad * HW), jnp.float32),
        grid_spec=pltpu.PrefetchScalarGridSpec(
            num_scalar_prefetch=0,
            grid=(num_steps,),
            in_specs=[
                pl.BlockSpec((Cin, L), lambda s: (0, s)),
                pl.BlockSpec((8, 128), lambda s: (0, 0)),
            ],
            out_specs=pl.BlockSpec((1, L), lambda s: (0, s)),
            scratch_shapes=[pltpu.VMEM((72, L), jnp.float32)],
        ),
        compiler_params=pltpu.CompilerParams(
            dimension_semantics=("parallel",)),
    )(x_slab, wpack)

    # Free reshape back to the PyTorch NCHW output layout.
    return out_slab.reshape(N_pad, 1, H, W)[:N]


def _reference_forward(x, params):
    """Pure-JAX NCHW reference with the module's eval-mode semantics (f32)."""
    N, _, H, W = x.shape
    eps = 1e-5
    wflip = jnp.flip(params["w1"], (2, 3))                    # (8,4,3,3)
    xpad = jnp.pad(x, ((0, 0), (0, 0), (1, 1), (1, 1)))
    y = jnp.zeros((N, 4, H, W), jnp.float32)
    for a in range(3):
        for b in range(3):
            patch = xpad[:, :, a:a + H, b:b + W]              # (N,8,H,W)
            y = y + jnp.einsum("ncij,cd->ndij", patch, wflip[:, :, a, b])
    y = y + params["b1"][None, :, None, None]
    scale = params["bn_gamma"] / jnp.sqrt(params["bn_var"] + eps)
    y = (y - params["bn_mean"][None, :, None, None]) * scale[None, :, None, None]
    y = y + params["bn_beta"][None, :, None, None]
    y = jnp.where(y >= 0.0, y, 0.2 * y)
    z = jnp.einsum("ncij,c->nij", y, params["w2"][:, 0, 0, 0])[:, None]
    z = z + params["b2"][0]
    return jnp.maximum(z, 0.0)


def _init_params(key):
    """Deterministic synthetic parameters with the module's shapes."""
    k = jax.random.split(key, 6)
    return {
        # ConvTranspose2d(8, 4, 3, 3): weight (in=8, out=4, 3, 3), bias (4,)
        "w1": 0.1 * jax.random.normal(k[0], (8, 4, 3, 3), jnp.float32),
        "b1": 0.05 * jax.random.normal(k[1], (4,), jnp.float32),
        # BatchNorm2d(4): gamma, beta, running_mean, running_var
        "bn_gamma": 1.0 + 0.1 * jax.random.normal(k[2], (4,), jnp.float32),
        "bn_beta": 0.05 * jax.random.normal(k[3], (4,), jnp.float32),
        "bn_mean": jnp.zeros((4,), jnp.float32),
        "bn_var": jnp.ones((4,), jnp.float32),
        # ConvTranspose2d(4, 1, 1, 1): weight (in=4, out=1, 1, 1), bias (1,)
        "w2": 0.1 * jax.random.normal(k[4], (4, 1, 1, 1), jnp.float32),
        "b2": 0.05 * jax.random.normal(k[5], (1,), jnp.float32),
    }


if __name__ == "__main__":
    key = jax.random.PRNGKey(0)
    key_x, key_p = jax.random.split(key)

    N, C, H, W = 2, 8, 16, 16            # module implies 8 input channels
    x = jax.random.normal(key_x, (N, C, H, W), jnp.float32)
    params = _init_params(key_p)

    out = layer_head_forward(x, params)
    out = jax.block_until_ready(out)
    assert out.shape == (N, 1, H, W)
    assert bool(jnp.all(out >= 0.0))     # final ReLU sanity check

    ref = _reference_forward(x, params)
    max_err = float(jnp.max(jnp.abs(out - ref)))
    assert max_err < 2e-2, f"kernel/reference mismatch: max_err={max_err}"

    print("KERNEL_OK")
</pallas_src>

<mosaic_0001>
module attributes {stable_mosaic.version = 11 : i64} {
  func.func @_layer_head_kernel(%arg0: i32, %arg1: memref<8x512xf32, #tpu.memory_space<vmem>>, %arg2: memref<8x128xf32, #tpu.memory_space<vmem>>, %arg3: memref<1x512xf32, #tpu.memory_space<vmem>>, %arg4: memref<72x512xf32, #tpu.memory_space<vmem>>) attributes {dimension_semantics = [#tpu.dimension_semantics<parallel>], iteration_bounds = array<i64: 1>, scalar_prefetch = 0 : i64, scratch_operands = 1 : i64, tpu.core_type = #tpu.core_type<tc>, window_params = [{transform_indices = @transform_0, window_bounds = array<i64: 8, 512>}, {pipeline_mode = #tpu.pipeline_mode<synchronous>, transform_indices = @transform_1, window_bounds = array<i64: 8, 128>}, {transform_indices = @transform_2, window_bounds = array<i64: 1, 512>}]} {
    %c0 = arith.constant 0 : index
    %c0_0 = arith.constant 0 : index
    %0 = vector.load %arg1[%c0, %c0_0] : memref<8x512xf32, #tpu.memory_space<vmem>>, vector<8x512xf32>
    %1 = tpu.iota {dimensions = array<i32: 1>} : vector<1x512xi32>
    %c255_i32 = arith.constant 255 : i32
    %2 = vector.broadcast %c255_i32 : i32 to vector<1x512xi32>
    %3 = arith.andi %1, %2 : vector<1x512xi32>
    %c15_i32 = arith.constant 15 : i32
    %4 = vector.broadcast %c15_i32 : i32 to vector<1x512xi32>
    %5 = arith.andi %3, %4 : vector<1x512xi32>
    %c16_i32 = arith.constant 16 : i32
    %6 = vector.broadcast %c16_i32 : i32 to vector<1x512xi32>
    %7 = arith.cmpi sge, %3, %6 : vector<1x512xi32>
    %c240_i32 = arith.constant 240 : i32
    %8 = vector.broadcast %c240_i32 : i32 to vector<1x512xi32>
    %9 = arith.cmpi slt, %3, %8 : vector<1x512xi32>
    %c0_i32 = arith.constant 0 : i32
    %10 = vector.broadcast %c0_i32 : i32 to vector<1x512xi32>
    %11 = arith.cmpi sgt, %5, %10 : vector<1x512xi32>
    %c15_i32_1 = arith.constant 15 : i32
    %12 = vector.broadcast %c15_i32_1 : i32 to vector<1x512xi32>
    %13 = arith.cmpi slt, %5, %12 : vector<1x512xi32>
    %c17_i32 = arith.constant 17 : i32
    %14 = tpu.dynamic_rotate %0 by %c17_i32 dim 1 : vector<8x512xf32>, i32 -> vector<8x512xf32>
    %15 = arith.andi %7, %11 : vector<1x512xi1>
    %cst = arith.constant 0.000000e+00 : f32
    %16 = vector.shape_cast %15 : vector<1x512xi1> to vector<1x512xi1>
    %17 = vector.broadcast %16 : vector<1x512xi1> to vector<8x512xi1>
    %18 = vector.broadcast %cst : f32 to vector<8x512xf32>
    %19 = arith.select %17, %14, %18 : vector<8x512xi1>, vector<8x512xf32>
    %c0_2 = arith.constant 0 : index
    %c0_3 = arith.constant 0 : index
    %20 = vector.load %arg4[%c0_2, %c0_3] : memref<72x512xf32, #tpu.memory_space<vmem>>, vector<8x512xf32>
    tpu.vector_store %arg4[%c0_2, %c0_3], %19 {strides = array<i32>} : memref<72x512xf32, #tpu.memory_space<vmem>>, vector<8x512xf32>,
    %c16_i32_4 = arith.constant 16 : i32
    %21 = tpu.dynamic_rotate %0 by %c16_i32_4 dim 1 : vector<8x512xf32>, i32 -> vector<8x512xf32>
    %cst_5 = arith.constant 0.000000e+00 : f32
    %22 = vector.shape_cast %7 : vector<1x512xi1> to vector<1x512xi1>
    %23 = vector.broadcast %22 : vector<1x512xi1> to vector<8x512xi1>
    %24 = vector.broadcast %cst_5 : f32 to vector<8x512xf32>
    %25 = arith.select %23, %21, %24 : vector<8x512xi1>, vector<8x512xf32>
    %c8 = arith.constant 8 : index
    %c0_6 = arith.constant 0 : index
    %26 = vector.load %arg4[%c8, %c0_6] : memref<72x512xf32, #tpu.memory_space<vmem>>, vector<8x512xf32>
    tpu.vector_store %arg4[%c8, %c0_6], %25 {strides = array<i32>} : memref<72x512xf32, #tpu.memory_space<vmem>>, vector<8x512xf32>,
    %c15_i32_7 = arith.constant 15 : i32
    %27 = tpu.dynamic_rotate %0 by %c15_i32_7 dim 1 : vector<8x512xf32>, i32 -> vector<8x512xf32>
    %28 = arith.andi %7, %13 : vector<1x512xi1>
    %cst_8 = arith.constant 0.000000e+00 : f32
    %29 = vector.shape_cast %28 : vector<1x512xi1> to vector<1x512xi1>
    %30 = vector.broadcast %29 : vector<1x512xi1> to vector<8x512xi1>
    %31 = vector.broadcast %cst_8 : f32 to vector<8x512xf32>
    %32 = arith.select %30, %27, %31 : vector<8x512xi1>, vector<8x512xf32>
    %c16 = arith.constant 16 : index
    %c0_9 = arith.constant 0 : index
    %33 = vector.load %arg4[%c16, %c0_9] : memref<72x512xf32, #tpu.memory_space<vmem>>, vector<8x512xf32>
    tpu.vector_store %arg4[%c16, %c0_9], %32 {strides = array<i32>} : memref<72x512xf32, #tpu.memory_space<vmem>>, vector<8x512xf32>,
    %c1_i32 = arith.constant 1 : i32
    %34 = tpu.dynamic_rotate %0 by %c1_i32 dim 1 : vector<8x512xf32>, i32 -> vector<8x512xf32>
    %cst_10 = arith.constant 0.000000e+00 : f32
    %35 = vector.shape_cast %11 : vector<1x512xi1> to vector<1x512xi1>
    %36 = vector.broadcast %35 : vector<1x512xi1> to vector<8x512xi1>
    %37 = vector.broadcast %cst_10 : f32 to vector<8x512xf32>
    %38 = arith.select %36, %34, %37 : vector<8x512xi1>, vector<8x512xf32>
    %c24 = arith.constant 24 : index
    %c0_11 = arith.constant 0 : index
    %39 = vector.load %arg4[%c24, %c0_11] : memref<72x512xf32, #tpu.memory_space<vmem>>, vector<8x512xf32>
    tpu.vector_store %arg4[%c24, %c0_11], %38 {strides = array<i32>} : memref<72x512xf32, #tpu.memory_space<vmem>>, vector<8x512xf32>,
    %c32 = arith.constant 32 : index
    %c0_12 = arith.constant 0 : index
    %40 = vector.load %arg4[%c32, %c0_12] : memref<72x512xf32, #tpu.memory_space<vmem>>, vector<8x512xf32>
    tpu.vector_store %arg4[%c32, %c0_12], %0 {strides = array<i32>} : memref<72x512xf32, #tpu.memory_space<vmem>>, vector<8x512xf32>,
    %c511_i32 = arith.constant 511 : i32
    %41 = tpu.dynamic_rotate %0 by %c511_i32 dim 1 : vector<8x512xf32>, i32 -> vector<8x512xf32>
    %cst_13 = arith.constant 0.000000e+00 : f32
    %42 = vector.shape_cast %13 : vector<1x512xi1> to vector<1x512xi1>
    %43 = vector.broadcast %42 : vector<1x512xi1> to vector<8x512xi1>
    %44 = vector.broadcast %cst_13 : f32 to vector<8x512xf32>
    %45 = arith.select %43, %41, %44 : vector<8x512xi1>, vector<8x512xf32>
    %c40 = arith.constant 40 : index
    %c0_14 = arith.constant 0 : index
    %46 = vector.load %arg4[%c40, %c0_14] : memref<72x512xf32, #tpu.memory_space<vmem>>, vector<8x512xf32>
    tpu.vector_store %arg4[%c40, %c0_14], %45 {strides = array<i32>} : memref<72x512xf32, #tpu.memory_space<vmem>>, vector<8x512xf32>,
    %c497_i32 = arith.constant 497 : i32
    %47 = tpu.dynamic_rotate %0 by %c497_i32 dim 1 : vector<8x512xf32>, i32 -> vector<8x512xf32>
    %48 = arith.andi %9, %11 : vector<1x512xi1>
    %cst_15 = arith.constant 0.000000e+00 : f32
    %49 = vector.shape_cast %48 : vector<1x512xi1> to vector<1x512xi1>
    %50 = vector.broadcast %49 : vector<1x512xi1> to vector<8x512xi1>
    %51 = vector.broadcast %cst_15 : f32 to vector<8x512xf32>
    %52 = arith.select %50, %47, %51 : vector<8x512xi1>, vector<8x512xf32>
    %c48 = arith.constant 48 : index
    %c0_16 = arith.constant 0 : index
    %53 = vector.load %arg4[%c48, %c0_16] : memref<72x512xf32, #tpu.memory_space<vmem>>, vector<8x512xf32>
    tpu.vector_store %arg4[%c48, %c0_16], %52 {strides = array<i32>} : memref<72x512xf32, #tpu.memory_space<vmem>>, vector<8x512xf32>,
    %c496_i32 = arith.constant 496 : i32
    %54 = tpu.dynamic_rotate %0 by %c496_i32 dim 1 : vector<8x512xf32>, i32 -> vector<8x512xf32>
    %cst_17 = arith.constant 0.000000e+00 : f32
    %55 = vector.shape_cast %9 : vector<1x512xi1> to vector<1x512xi1>
    %56 = vector.broadcast %55 : vector<1x512xi1> to vector<8x512xi1>
    %57 = vector.broadcast %cst_17 : f32 to vector<8x512xf32>
    %58 = arith.select %56, %54, %57 : vector<8x512xi1>, vector<8x512xf32>
    %c56 = arith.constant 56 : index
    %c0_18 = arith.constant 0 : index
    %59 = vector.load %arg4[%c56, %c0_18] : memref<72x512xf32, #tpu.memory_space<vmem>>, vector<8x512xf32>
    tpu.vector_store %arg4[%c56, %c0_18], %58 {strides = array<i32>} : memref<72x512xf32, #tpu.memory_space<vmem>>, vector<8x512xf32>,
    %c495_i32 = arith.constant 495 : i32
    %60 = tpu.dynamic_rotate %0 by %c495_i32 dim 1 : vector<8x512xf32>, i32 -> vector<8x512xf32>
    %61 = arith.andi %9, %13 : vector<1x512xi1>
    %cst_19 = arith.constant 0.000000e+00 : f32
    %62 = vector.shape_cast %61 : vector<1x512xi1> to vector<1x512xi1>
    %63 = vector.broadcast %62 : vector<1x512xi1> to vector<8x512xi1>
    %64 = vector.broadcast %cst_19 : f32 to vector<8x512xf32>
    %65 = arith.select %63, %60, %64 : vector<8x512xi1>, vector<8x512xf32>
    %c64 = arith.constant 64 : index
    %c0_20 = arith.constant 0 : index
    %66 = vector.load %arg4[%c64, %c0_20] : memref<72x512xf32, #tpu.memory_space<vmem>>, vector<8x512xf32>
    tpu.vector_store %arg4[%c64, %c0_20], %65 {strides = array<i32>} : memref<72x512xf32, #tpu.memory_space<vmem>>, vector<8x512xf32>,
    %c0_21 = arith.constant 0 : index
    %c0_22 = arith.constant 0 : index
    %67 = vector.load %arg2[%c0_21, %c0_22] : memref<8x128xf32, #tpu.memory_space<vmem>>, vector<4x72xf32>
    %68 = arith.truncf %67 : vector<4x72xf32> to vector<4x72xbf16>
    %c0_23 = arith.constant 0 : index
    %c0_24 = arith.constant 0 : index
    %69 = vector.load %arg4[%c0_23, %c0_24] : memref<72x512xf32, #tpu.memory_space<vmem>>, vector<72x512xf32>
    %70 = arith.truncf %69 : vector<72x512xf32> to vector<72x512xbf16>
    %cst_25 = arith.constant dense<0.000000e+00> : vector<4x512xf32>
    %71 = tpu.matmul %68, %70, %cst_25 {dimension_numbers = #tpu.dot_dimension_numbers<[1], [0], [0], [1], [0, 0, 1, 1], [], []>} : vector<4x72xbf16>, vector<72x512xbf16>, vector<4x512xf32> -> vector<4x512xf32>
    %c0_26 = arith.constant 0 : index
    %c72 = arith.constant 72 : index
    %72 = vector.load %arg2[%c0_26, %c72] : memref<8x128xf32, #tpu.memory_space<vmem>>, vector<4x1xf32>
    %73 = vector.broadcast %72 : vector<4x1xf32> to vector<4x512xf32>
    %74 = arith.addf %71, %73 : vector<4x512xf32>
    %cst_27 = arith.constant 0.000000e+00 : f32
    %75 = vector.broadcast %cst_27 : f32 to vector<4x512xf32>
    %76 = arith.cmpf oge, %74, %75 : vector<4x512xf32>
    %cst_28 = arith.constant 2.000000e-01 : f32
    %77 = vector.broadcast %cst_28 : f32 to vector<4x512xf32>
    %78 = arith.mulf %77, %74 : vector<4x512xf32>
    %79 = arith.select %76, %74, %78 : vector<4x512xi1>, vector<4x512xf32>
    %c0_29 = arith.constant 0 : index
    %c73 = arith.constant 73 : index
    %80 = vector.load %arg2[%c0_29, %c73] : memref<8x128xf32, #tpu.memory_space<vmem>>, vector<4x1xf32>
    %81 = vector.broadcast %80 : vector<4x1xf32> to vector<4x512xf32>
    %82 = arith.mulf %79, %81 : vector<4x512xf32>
    %cst_30 = arith.constant dense<0.000000e+00> : vector<512xf32>
    %83 = vector.multi_reduction <add>, %82, %cst_30 [0] : vector<4x512xf32> to vector<512xf32>
    %84 = vector.shape_cast %83 : vector<512xf32> to vector<1x512xf32>
    %c0_31 = arith.constant 0 : index
    %c74 = arith.constant 74 : index
    %85 = vector.load %arg2[%c0_31, %c74] : memref<8x128xf32, #tpu.memory_space<vmem>>, vector<1x1xf32>
    %86 = vector.broadcast %85 : vector<1x1xf32> to vector<1x512xf32>
    %87 = arith.addf %84, %86 : vector<1x512xf32>
    %cst_32 = arith.constant 0.000000e+00 : f32
    %88 = vector.broadcast %cst_32 : f32 to vector<1x512xf32>
    %89 = arith.maximumf %87, %88 : vector<1x512xf32>
    %c0_33 = arith.constant 0 : index
    %c0_34 = arith.constant 0 : index
    %90 = vector.load %arg3[%c0_33, %c0_34] : memref<1x512xf32, #tpu.memory_space<vmem>>, vector<1x512xf32>
    tpu.vector_store %arg3[%c0_33, %c0_34], %89 {strides = array<i32>} : memref<1x512xf32, #tpu.memory_space<vmem>>, vector<1x512xf32>,
    return
  }
  func.func @transform_0(%arg0: i32) -> (i32, i32) {
    %c0_i32 = arith.constant 0 : i32
    %c0_i32_0 = arith.constant 0 : i32
    return %c0_i32, %arg0 : i32, i32
  }
  func.func @transform_1(%arg0: i32) -> (i32, i32) {
    %c0_i32 = arith.constant 0 : i32
    %c0_i32_0 = arith.constant 0 : i32
    %c0_i32_1 = arith.constant 0 : i32
    return %c0_i32, %c0_i32_0 : i32, i32
  }
  func.func @transform_2(%arg0: i32) -> (i32, i32) {
    %c0_i32 = arith.constant 0 : i32
    %c0_i32_0 = arith.constant 0 : i32
    return %c0_i32, %arg0 : i32, i32
  }
}

</mosaic_0001>

<llo_original>
// kernel: tpu_custom_call.1
$region0: #{tpu_custom_call.1}
  #allocation0 [shape = 'u32[]', space=smem, size = 0x4, offset = 0x4, fixed_abs, tag = 'smem constant byte address 0x4 - core index']
  #allocation1 [shape = 'u32[144,128]{1,0:T(1,128)}', space=vmem, size = 0x12000, scoped, tag = 'internal scratch']
  #allocation2 [shape = 'f32[72,512]{1,0:T(8,128)}', space=vmem, size = 0x24000, scoped, tag = 'scratch operand']
  %s0 = inlined_call_operand.hbm [shape: f32[8,512], index: 0, kind: input, shape index: {}]
  %s1 = inlined_call_operand.hbm [shape: f32[8,128], index: 1, kind: input, shape index: {}]
  %s2 = inlined_call_operand.hbm [shape: f32[1,512], index: 2, kind: output, shape index: {}]
  %s3 = sld [smem:[#allocation0]]
  $region26: #{tpu_custom_call.1} parent=0
    _
  %s5 = ssub.s32 1, %s3
  %s6 = scalar_select 0, %s5, %s3
  $region1: #{tpu_custom_call.1} parent=0
    #allocation3 [shape = 'u8[16384]{0}', space=vmem, size = 0x4000, scoped, tag = 'input window, operand 0, single buffered']
    #allocation4 [shape = 's32[1]{0}', space=sflag, size = 0x4, scoped, tag = 'scoped memory for tpu_custom_call.1']
    #allocation5 [shape = 's32[1]{0}', space=sflag, size = 0x4, scoped, tag = 'scoped memory for tpu_custom_call.1']
    #allocation6 [shape = 'u8[4096]{0}', space=vmem, size = 0x1000, scoped, tag = 'input window, operand 1, single buffered']
    #allocation7 [shape = 's32[1]{0}', space=sflag, size = 0x4, scoped, tag = 'scoped memory for tpu_custom_call.1']
    #allocation8 [shape = 'u8[2048]{0}', space=vmem, size = 0x800, scoped, tag = 'output window, operand 0, single buffered']
    %7 = vsyncpa [#allocation4], 0
    %8 = vsyncpa [#allocation7], 0
    %9 = vsyncpa [#allocation5], 0
    // Predicated region
    $region2: #{tpu_custom_call.1} parent=1 // pred_check
      _
    $region3: #{tpu_custom_call.1} parent=1 // pred_check_branch
      %11 = sbr.rel (0) target = $region5
    $region4: #{tpu_custom_call.1} parent=1 // pred_region
      %s13 = ssub.s32 512, 512
      %14 = vsyncadd [#allocation4], %s13
      %s16 = sshll.u32 [#allocation3], 4
      %s17 = int_to_ptr.vmem [resolvable:$true] %s16
      %19 = dma.hbm_to_vmem [thread:$0]  %s0, 512, %s17, [#allocation4]
    $region5: #{tpu_custom_call.1} parent=1 // pred_fallthru
      _
    // Predicated region
    $region6: #{tpu_custom_call.1} parent=1 // pred_check
      _
    $region7: #{tpu_custom_call.1} parent=1 // pred_check_branch
      %21 = sbr.rel (0) target = $region9
    $region8: #{tpu_custom_call.1} parent=1 // pred_region
      %s23 = ssub.s32 128, 128
      %24 = vsyncadd [#allocation7], %s23
      %s26 = sshll.u32 [#allocation6], 4
      %s27 = int_to_ptr.vmem [resolvable:$true] %s26
      %29 = dma.hbm_to_vmem [thread:$0]  %s1, 128, %s27, [#allocation7]
    $region9: #{tpu_custom_call.1} parent=1 // pred_fallthru
      _
    // Predicated region
    $region10: #{tpu_custom_call.1} parent=1 // pred_check
      _
    $region11: #{tpu_custom_call.1} parent=1 // pred_check_branch
      %31 = sbr.rel (0) target = $region13
    $region12: #{tpu_custom_call.1} parent=1 // pred_region
      %32 = dma.done [#allocation4], 512
    $region13: #{tpu_custom_call.1} parent=1 // pred_fallthru
      _
    // Predicated region
    $region14: #{tpu_custom_call.1} parent=1 // pred_check
      _
    $region15: #{tpu_custom_call.1} parent=1 // pred_check_branch
      %34 = sbr.rel (0) target = $region17
    $region16: #{tpu_custom_call.1} parent=1 // pred_region
      %35 = dma.done [#allocation7], 128
    $region17: #{tpu_custom_call.1} parent=1 // pred_fallthru
      _
    %v37 = vld [vmem:[#allocation3] sm:$0xff]
    %v38 = vld [vmem:[#allocation3 + $0x8] sm:$0xff]
    %v39 = vld [vmem:[#allocation3 + $0x10] sm:$0xff]
    %v40 = vld [vmem:[#allocation3 + $0x18] sm:$0xff]
    %v41 = vlaneseq
    %v42 = vand.u32 %v41, 127
    %v43 = vadd.s32 %v42, 128
    %v44 = vadd.s32 %v42, 256
    %v45 = vadd.s32 %v42, 384
    %v46 = vand.u32 %v42, 255
    %v47 = vand.u32 %v43, 255
    %v48 = vand.u32 %v44, 255
    %v49 = vand.u32 %v45, 255
    %v50 = vand.u32 %v46, 15
    %v51 = vand.u32 %v47, 15
    %v52 = vand.u32 %v48, 15
    %v53 = vand.u32 %v49, 15
    %vm54 = vcmp.ge.s32.totalorder %v46, 16
    %vm55 = vcmp.ge.s32.totalorder %v47, 16
    %vm56 = vcmp.ge.s32.totalorder %v48, 16
    %vm57 = vcmp.ge.s32.totalorder %v49, 16
    %vm58 = vcmp.lt.s32.totalorder %v46, 240
    %vm59 = vcmp.lt.s32.totalorder %v47, 240
    %vm60 = vcmp.lt.s32.totalorder %v48, 240
    %vm61 = vcmp.lt.s32.totalorder %v49, 240
    %vm62 = vcmp.gt.s32.totalorder %v50, 0
    %vm63 = vcmp.gt.s32.totalorder %v51, 0
    %vm64 = vcmp.gt.s32.totalorder %v52, 0
    %vm65 = vcmp.gt.s32.totalorder %v53, 0
    %vm66 = vcmp.lt.s32.totalorder %v50, 15
    %vm67 = vcmp.lt.s32.totalorder %v51, 15
    %vm68 = vcmp.lt.s32.totalorder %v52, 15
    %vm69 = vcmp.lt.s32.totalorder %v53, 15
    %70 = vrot.lane.b32.xlu0 %v37, 17
    %v71 = vpop.permute.xlu0 %70
    %72 = vrot.lane.b32.xlu0 %v38, 17
    %v73 = vpop.permute.xlu0 %72
    %74 = vrot.lane.b32.xlu0 %v39, 17
    %v75 = vpop.permute.xlu0 %74
    %76 = vrot.lane.b32.xlu0 %v40, 17
    %v77 = vpop.permute.xlu0 %76
    %vm78 = vcmp.lt.s32.totalorder %v42, 17
    %v79 = vsel %vm78, %v75, %v77
    %v80 = vsel %vm78, %v73, %v75
    %v81 = vsel %vm78, %v71, %v73
    %v82 = vsel %vm78, %v77, %v71
    %vm83 = vmand %vm54, %vm62
    %vm84 = vmand %vm55, %vm63
    %vm85 = vmand %vm56, %vm64
    %vm86 = vmand %vm57, %vm65
    %v87 = vsel %vm83, 1, 0
    %v88 = vsel %vm84, 1, 0
    %v89 = vsel %vm85, 1, 0
    %v90 = vsel %vm86, 1, 0
    %vm91 = vcmp.eq.s32.totalorder %v87, 1
    %vm92 = vcmp.eq.s32.totalorder %v88, 1
    %vm93 = vcmp.eq.s32.totalorder %v89, 1
    %vm94 = vcmp.eq.s32.totalorder %v90, 1
    %v95 = vsel %vm91, %v82, 0.0
    %v96 = vsel %vm92, %v81, 0.0
    %v97 = vsel %vm93, %v80, 0.0
    %v98 = vsel %vm94, %v79, 0.0
    %99 = vst [vmem:[#allocation2] sm:$0xff] %v95
    %100 = vst [vmem:[#allocation2 + $0x8] sm:$0xff] %v96
    %101 = vst [vmem:[#allocation2 + $0x10] sm:$0xff] %v97
    %102 = vst [vmem:[#allocation2 + $0x18] sm:$0xff] %v98
    %103 = vrot.lane.b32.xlu0 %v37, 16
    %v104 = vpop.permute.xlu0 %103
    %105 = vrot.lane.b32.xlu0 %v38, 16
    %v106 = vpop.permute.xlu0 %105
    %107 = vrot.lane.b32.xlu0 %v39, 16
    %v108 = vpop.permute.xlu0 %107
    %109 = vrot.lane.b32.xlu0 %v40, 16
    %v110 = vpop.permute.xlu0 %109
    %vm111 = vcmp.lt.s32.totalorder %v42, 16
    %v112 = vsel %vm111, %v108, %v110
    %v113 = vsel %vm111, %v106, %v108
    %v114 = vsel %vm111, %v104, %v106
    %v115 = vsel %vm111, %v110, %v104
    %v116 = vsel %vm54, 1, 0
    %v117 = vsel %vm55, 1, 0
    %v118 = vsel %vm56, 1, 0
    %v119 = vsel %vm57, 1, 0
    %vm120 = vcmp.eq.s32.totalorder %v116, 1
    %vm121 = vcmp.eq.s32.totalorder %v117, 1
    %vm122 = vcmp.eq.s32.totalorder %v118, 1
    %vm123 = vcmp.eq.s32.totalorder %v119, 1
    %v124 = vsel %vm120, %v115, 0.0
    %v125 = vsel %vm121, %v114, 0.0
    %v126 = vsel %vm122, %v113, 0.0
    %v127 = vsel %vm123, %v112, 0.0
    %128 = vst [vmem:[#allocation2 + $0x20] sm:$0xff] %v124
    %129 = vst [vmem:[#allocation2 + $0x28] sm:$0xff] %v125
    %130 = vst [vmem:[#allocation2 + $0x30] sm:$0xff] %v126
    %131 = vst [vmem:[#allocation2 + $0x38] sm:$0xff] %v127
    %132 = vrot.lane.b32.xlu0 %v37, 15
    %v133 = vpop.permute.xlu0 %132
    %134 = vrot.lane.b32.xlu0 %v38, 15
    %v135 = vpop.permute.xlu0 %134
    %136 = vrot.lane.b32.xlu0 %v39, 15
    %v137 = vpop.permute.xlu0 %136
    %138 = vrot.lane.b32.xlu0 %v40, 15
    %v139 = vpop.permute.xlu0 %138
    %vm140 = vcmp.lt.s32.totalorder %v42, 15
    %v141 = vsel %vm140, %v137, %v139
    %v142 = vsel %vm140, %v135, %v137
    %v143 = vsel %vm140, %v133, %v135
    %v144 = vsel %vm140, %v139, %v133
    %vm145 = vmand %vm54, %vm66
    %vm146 = vmand %vm55, %vm67
    %vm147 = vmand %vm56, %vm68
    %vm148 = vmand %vm57, %vm69
    %v149 = vsel %vm145, 1, 0
    %v150 = vsel %vm146, 1, 0
    %v151 = vsel %vm147, 1, 0
    %v152 = vsel %vm148, 1, 0
    %vm153 = vcmp.eq.s32.totalorder %v149, 1
    %vm154 = vcmp.eq.s32.totalorder %v150, 1
    %vm155 = vcmp.eq.s32.totalorder %v151, 1
    %vm156 = vcmp.eq.s32.totalorder %v152, 1
    %v157 = vsel %vm153, %v144, 0.0
    %v158 = vsel %vm154, %v143, 0.0
    %v159 = vsel %vm155, %v142, 0.0
    %v160 = vsel %vm156, %v141, 0.0
    %161 = vst [vmem:[#allocation2 + $0x40] sm:$0xff] %v157
    %162 = vst [vmem:[#allocation2 + $0x48] sm:$0xff] %v158
    %163 = vst [vmem:[#allocation2 + $0x50] sm:$0xff] %v159
    %164 = vst [vmem:[#allocation2 + $0x58] sm:$0xff] %v160
    %165 = vrot.lane.b32.xlu0 %v37, 1
    %v166 = vpop.permute.xlu0 %165
    %167 = vrot.lane.b32.xlu0 %v38, 1
    %v168 = vpop.permute.xlu0 %167
    %169 = vrot.lane.b32.xlu0 %v39, 1
    %v170 = vpop.permute.xlu0 %169
    %171 = vrot.lane.b32.xlu0 %v40, 1
    %v172 = vpop.permute.xlu0 %171
    %vm173 = vcmp.lt.s32.totalorder %v42, 1
    %v174 = vsel %vm173, %v170, %v172
    %v175 = vsel %vm173, %v168, %v170
    %v176 = vsel %vm173, %v166, %v168
    %v177 = vsel %vm173, %v172, %v166
    %v178 = vsel %vm62, 1, 0
    %v179 = vsel %vm63, 1, 0
    %v180 = vsel %vm64, 1, 0
    %v181 = vsel %vm65, 1, 0
    %vm182 = vcmp.eq.s32.totalorder %v178, 1
    %vm183 = vcmp.eq.s32.totalorder %v179, 1
    %vm184 = vcmp.eq.s32.totalorder %v180, 1
    %vm185 = vcmp.eq.s32.totalorder %v181, 1
    %v186 = vsel %vm182, %v177, 0.0
    %v187 = vsel %vm183, %v176, 0.0
    %v188 = vsel %vm184, %v175, 0.0
    %v189 = vsel %vm185, %v174, 0.0
    %190 = vst [vmem:[#allocation2 + $0x60] sm:$0xff] %v186
    %191 = vst [vmem:[#allocation2 + $0x68] sm:$0xff] %v187
    %192 = vst [vmem:[#allocation2 + $0x70] sm:$0xff] %v188
    %193 = vst [vmem:[#allocation2 + $0x78] sm:$0xff] %v189
    %194 = vst [vmem:[#allocation2 + $0x80] sm:$0xff] %v37
    %195 = vst [vmem:[#allocation2 + $0x88] sm:$0xff] %v38
    %196 = vst [vmem:[#allocation2 + $0x90] sm:$0xff] %v39
    %197 = vst [vmem:[#allocation2 + $0x98] sm:$0xff] %v40
    %198 = vrot.lane.b32.xlu0 %v37, 127
    %v199 = vpop.permute.xlu0 %198
    %200 = vrot.lane.b32.xlu0 %v38, 127
    %v201 = vpop.permute.xlu0 %200
    %202 = vrot.lane.b32.xlu0 %v39, 127
    %v203 = vpop.permute.xlu0 %202
    %204 = vrot.lane.b32.xlu0 %v40, 127
    %v205 = vpop.permute.xlu0 %204
    %vm206 = vcmp.lt.s32.totalorder %v42, 127
    %v207 = vsel %vm206, %v203, %v205
    %v208 = vsel %vm206, %v201, %v203
    %v209 = vsel %vm206, %v199, %v201
    %v210 = vsel %vm206, %v205, %v199
    %v211 = vsel %vm66, 1, 0
    %v212 = vsel %vm67, 1, 0
    %v213 = vsel %vm68, 1, 0
    %v214 = vsel %vm69, 1, 0
    %vm215 = vcmp.eq.s32.totalorder %v211, 1
    %vm216 = vcmp.eq.s32.totalorder %v212, 1
    %vm217 = vcmp.eq.s32.totalorder %v213, 1
    %vm218 = vcmp.eq.s32.totalorder %v214, 1
    %v219 = vsel %vm215, %v209, 0.0
    %v220 = vsel %vm216, %v208, 0.0
    %v221 = vsel %vm217, %v207, 0.0
    %v222 = vsel %vm218, %v210, 0.0
    %223 = vst [vmem:[#allocation2 + $0xa0] sm:$0xff] %v219
    %224 = vst [vmem:[#allocation2 + $0xa8] sm:$0xff] %v220
    %225 = vst [vmem:[#allocation2 + $0xb0] sm:$0xff] %v221
    %226 = vst [vmem:[#allocation2 + $0xb8] sm:$0xff] %v222
    %227 = vrot.lane.b32.xlu0 %v37, 113
    %v228 = vpop.permute.xlu0 %227
    %229 = vrot.lane.b32.xlu0 %v38, 113
    %v230 = vpop.permute.xlu0 %229
    %231 = vrot.lane.b32.xlu0 %v39, 113
    %v232 = vpop.permute.xlu0 %231
    %233 = vrot.lane.b32.xlu0 %v40, 113
    %v234 = vpop.permute.xlu0 %233
    %vm235 = vcmp.lt.s32.totalorder %v42, 113
    %v236 = vsel %vm235, %v232, %v234
    %v237 = vsel %vm235, %v230, %v232
    %v238 = vsel %vm235, %v228, %v230
    %v239 = vsel %vm235, %v234, %v228
    %vm240 = vmand %vm58, %vm62
    %vm241 = vmand %vm59, %vm63
    %vm242 = vmand %vm60, %vm64
    %vm243 = vmand %vm61, %vm65
    %v244 = vsel %vm240, 1, 0
    %v245 = vsel %vm241, 1, 0
    %v246 = vsel %vm242, 1, 0
    %v247 = vsel %vm243, 1, 0
    %vm248 = vcmp.eq.s32.totalorder %v244, 1
    %vm249 = vcmp.eq.s32.totalorder %v245, 1
    %vm250 = vcmp.eq.s32.totalorder %v246, 1
    %vm251 = vcmp.eq.s32.totalorder %v247, 1
    %v252 = vsel %vm248, %v238, 0.0
    %v253 = vsel %vm249, %v237, 0.0
    %v254 = vsel %vm250, %v236, 0.0
    %v255 = vsel %vm251, %v239, 0.0
    %256 = vst [vmem:[#allocation2 + $0xc0] sm:$0xff] %v252
    %257 = vst [vmem:[#allocation2 + $0xc8] sm:$0xff] %v253
    %258 = vst [vmem:[#allocation2 + $0xd0] sm:$0xff] %v254
    %259 = vst [vmem:[#allocation2 + $0xd8] sm:$0xff] %v255
    %260 = vrot.lane.b32.xlu0 %v37, 112
    %v261 = vpop.permute.xlu0 %260
    %262 = vrot.lane.b32.xlu0 %v38, 112
    %v263 = vpop.permute.xlu0 %262
    %264 = vrot.lane.b32.xlu0 %v39, 112
    %v265 = vpop.permute.xlu0 %264
    %266 = vrot.lane.b32.xlu0 %v40, 112
    %v267 = vpop.permute.xlu0 %266
    %vm268 = vcmp.lt.s32.totalorder %v42, 112
    %v269 = vsel %vm268, %v265, %v267
    %v270 = vsel %vm268, %v263, %v265
    %v271 = vsel %vm268, %v261, %v263
    %v272 = vsel %vm268, %v267, %v261
    %v273 = vsel %vm58, 1, 0
    %v274 = vsel %vm59, 1, 0
    %v275 = vsel %vm60, 1, 0
    %v276 = vsel %vm61, 1, 0
    %vm277 = vcmp.eq.s32.totalorder %v273, 1
    %vm278 = vcmp.eq.s32.totalorder %v274, 1
    %vm279 = vcmp.eq.s32.totalorder %v275, 1
    %vm280 = vcmp.eq.s32.totalorder %v276, 1
    %v281 = vsel %vm277, %v271, 0.0
    %v282 = vsel %vm278, %v270, 0.0
    %v283 = vsel %vm279, %v269, 0.0
    %v284 = vsel %vm280, %v272, 0.0
    %285 = vst [vmem:[#allocation2 + $0xe0] sm:$0xff] %v281
    %286 = vst [vmem:[#allocation2 + $0xe8] sm:$0xff] %v282
    %287 = vst [vmem:[#allocation2 + $0xf0] sm:$0xff] %v283
    %288 = vst [vmem:[#allocation2 + $0xf8] sm:$0xff] %v284
    %289 = vrot.lane.b32.xlu0 %v37, 111
    %v290 = vpop.permute.xlu0 %289
    %291 = vrot.lane.b32.xlu0 %v38, 111
    %v292 = vpop.permute.xlu0 %291
    %293 = vrot.lane.b32.xlu0 %v39, 111
    %v294 = vpop.permute.xlu0 %293
    %295 = vrot.lane.b32.xlu0 %v40, 111
    %v296 = vpop.permute.xlu0 %295
    %vm297 = vcmp.lt.s32.totalorder %v42, 111
    %v298 = vsel %vm297, %v294, %v296
    %v299 = vsel %vm297, %v292, %v294
    %v300 = vsel %vm297, %v290, %v292
    %v301 = vsel %vm297, %v296, %v290
    %vm302 = vmand %vm58, %vm66
    %vm303 = vmand %vm59, %vm67
    %vm304 = vmand %vm60, %vm68
    %vm305 = vmand %vm61, %vm69
    %v306 = vsel %vm302, 1, 0
    %v307 = vsel %vm303, 1, 0
    %v308 = vsel %vm304, 1, 0
    %v309 = vsel %vm305, 1, 0
    %vm310 = vcmp.eq.s32.totalorder %v306, 1
    %vm311 = vcmp.eq.s32.totalorder %v307, 1
    %vm312 = vcmp.eq.s32.totalorder %v308, 1
    %vm313 = vcmp.eq.s32.totalorder %v309, 1
    %v314 = vsel %vm310, %v300, 0.0
    %v315 = vsel %vm311, %v299, 0.0
    %v316 = vsel %vm312, %v298, 0.0
    %v317 = vsel %vm313, %v301, 0.0
    %318 = vst [vmem:[#allocation2 + $0x100] sm:$0xff] %v314
    %319 = vst [vmem:[#allocation2 + $0x108] sm:$0xff] %v315
    %320 = vst [vmem:[#allocation2 + $0x110] sm:$0xff] %v316
    %321 = vst [vmem:[#allocation2 + $0x118] sm:$0xff] %v317
    %v322 = vld [vmem:[#allocation6] sm:$0xf]
    %v323 = vpack.c.bf16 %v322, %v322
    %v324 = vld [vmem:[#allocation2] sm:$0xff]
    %v325 = vld [vmem:[#allocation2 + $0x8] sm:$0xff]
    %v326 = vld [vmem:[#allocation2 + $0x10] sm:$0xff]
    %v327 = vld [vmem:[#allocation2 + $0x18] sm:$0xff]
    %v328 = vld [vmem:[#allocation2 + $0x20] sm:$0xff]
    %v329 = vld [vmem:[#allocation2 + $0x28] sm:$0xff]
    %v330 = vld [vmem:[#allocation2 + $0x30] sm:$0xff]
    %v331 = vld [vmem:[#allocation2 + $0x38] sm:$0xff]
    %v332 = vld [vmem:[#allocation2 + $0x40] sm:$0xff]
    %v333 = vld [vmem:[#allocation2 + $0x48] sm:$0xff]
    %v334 = vld [vmem:[#allocation2 + $0x50] sm:$0xff]
    %v335 = vld [vmem:[#allocation2 + $0x58] sm:$0xff]
    %v336 = vld [vmem:[#allocation2 + $0x60] sm:$0xff]
    %v337 = vld [vmem:[#allocation2 + $0x68] sm:$0xff]
    %v338 = vld [vmem:[#allocation2 + $0x70] sm:$0xff]
    %v339 = vld [vmem:[#allocation2 + $0x78] sm:$0xff]
    %v340 = vld [vmem:[#allocation2 + $0x80] sm:$0xff]
    %v341 = vld [vmem:[#allocation2 + $0x88] sm:$0xff]
    %v342 = vld [vmem:[#allocation2 + $0x90] sm:$0xff]
    %v343 = vld [vmem:[#allocation2 + $0x98] sm:$0xff]
    %v344 = vld [vmem:[#allocation2 + $0xa0] sm:$0xff]
    %v345 = vld [vmem:[#allocation2 + $0xa8] sm:$0xff]
    %v346 = vld [vmem:[#allocation2 + $0xb0] sm:$0xff]
    %v347 = vld [vmem:[#allocation2 + $0xb8] sm:$0xff]
    %v348 = vld [vmem:[#allocation2 + $0xc0] sm:$0xff]
    %v349 = vld [vmem:[#allocation2 + $0xc8] sm:$0xff]
    %v350 = vld [vmem:[#allocation2 + $0xd0] sm:$0xff]
    %v351 = vld [vmem:[#allocation2 + $0xd8] sm:$0xff]
    %v352 = vld [vmem:[#allocation2 + $0xe0] sm:$0xff]
    %v353 = vld [vmem:[#allocation2 + $0xe8] sm:$0xff]
    %v354 = vld [vmem:[#allocation2 + $0xf0] sm:$0xff]
    %v355 = vld [vmem:[#allocation2 + $0xf8] sm:$0xff]
    %v356 = vld [vmem:[#allocation2 + $0x100] sm:$0xff]
    %v357 = vld [vmem:[#allocation2 + $0x108] sm:$0xff]
    %v358 = vld [vmem:[#allocation2 + $0x110] sm:$0xff]
    %v359 = vld [vmem:[#allocation2 + $0x118] sm:$0xff]
    %v360 = vpack.c.bf16 %v328, %v324
    %v361 = vpack.c.bf16 %v329, %v325
    %v362 = vpack.c.bf16 %v330, %v326
    %v363 = vpack.c.bf16 %v331, %v327
    %v364 = vpack.c.bf16 %v336, %v332
    %v365 = vpack.c.bf16 %v337, %v333
    %v366 = vpack.c.bf16 %v338, %v334
    %v367 = vpack.c.bf16 %v339, %v335
    %v368 = vpack.c.bf16 %v344, %v340
    %v369 = vpack.c.bf16 %v345, %v341
    %v370 = vpack.c.bf16 %v346, %v342
    %v371 = vpack.c.bf16 %v347, %v343
    %v372 = vpack.c.bf16 %v352, %v348
    %v373 = vpack.c.bf16 %v353, %v349
    %v374 = vpack.c.bf16 %v354, %v350
    %v375 = vpack.c.bf16 %v355, %v351
    %v376 = vpack.c.bf16 %v356, %v356
    %v377 = vpack.c.bf16 %v357, %v357
    %v378 = vpack.c.bf16 %v358, %v358
    %v379 = vpack.c.bf16 %v359, %v359
    %381 = vset.pattern.permute.xlu0 72
    %382 = vperm.xlu0 %381, %v322
    %v383 = vpop.permute.xlu0 %382
    %vm385 = vcmask 588800
    %v387 = vsel %vm385, %v323, 0
    %vm389 = vcmask 1043456
    %v391 = vsel %vm389, %v376, 0
    %v394 = vsel %vm389, %v377, 0
    %v397 = vsel %vm389, %v378, 0
    %v400 = vsel %vm389, %v379, 0
    %402 = vmatprep.subr.bf16.mxu0 0
    %403 = vmatpush1.bf16.msra.mxu0 0
    %404 = vmatprep.subr.bf16.mxu0 0
    %405 = vmatpush1.bf16.msra.mxu0 0
    %406 = vmatprep.subr.bf16.mxu0 0
    %407 = vmatpush1.bf16.msra.mxu0 0
    %408 = vmatprep.subr.bf16.mxu0 %v394
    %409 = vmatpush1.bf16.msra.mxu0 %v391
    %410 = vmatprep.subr.bf16.mxu0 %v373
    %411 = vmatpush1.bf16.msra.mxu0 %v372
    %412 = vmatprep.subr.bf16.mxu0 %v369
    %413 = vmatpush1.bf16.msra.mxu0 %v368
    %414 = vmatprep.subr.bf16.mxu0 %v365
    %415 = vmatpush1.bf16.msra.mxu0 %v364
    %416 = vmatprep.subr.bf16.mxu0 %v361
    %417 = vmatpush1.bf16.msra.mxu0 %v360
    %418 = vmatprep.subr.bf16.mxu0 0
    %419 = vmatpush2.bf16.msra.mxu0 0
    %420 = vmatprep.subr.bf16.mxu0 0
    %421 = vmatpush2.bf16.msra.mxu0 0
    %422 = vmatprep.subr.bf16.mxu0 0
    %423 = vmatpush2.bf16.msra.mxu0 0
    %424 = vmatprep.subr.bf16.mxu0 0
    %425 = vmatpush2.bf16.msra.mxu0 0
    %426 = vmatprep.subr.bf16.mxu0 0
    %427 = vmatpush2.bf16.msra.mxu0 0
    %428 = vmatprep.subr.bf16.mxu0 0
    %429 = vmatpush2.bf16.msra.mxu0 0
    %430 = vmatprep.subr.bf16.mxu0 0
    %431 = vmatpush2.bf16.msra.mxu0 0
    %432 = vmatprep.subr.bf16.mxu0 0
    %433 = vmatpush2.bf16.msra.mxu0 0
    %434 = vmatprep.mubr.bf16.mxu0 0
    %435 = vmatmul.mubr.bf16.gmra.mxu0 %v387
    %v436 = vpop.f32.mrf.mxu0
    %v437 = vadd.f32 %v383, %v436
    %v438 = vpop.f32.mrf.mxu0
    %v439 = vadd.f32 %v383, %v438
    %v440 = vpop.f32.mrf.mxu0
    %v441 = vpop.f32.mrf.mxu0
    %442 = vdwg.mxu0
    %443 = vmatprep.subr.bf16.mxu0 0
    %444 = vmatpush1.bf16.msra.mxu0 0
    %445 = vmatprep.subr.bf16.mxu0 0
    %446 = vmatpush1.bf16.msra.mxu0 0
    %447 = vmatprep.subr.bf16.mxu0 0
    %448 = vmatpush1.bf16.msra.mxu0 0
    %449 = vmatprep.subr.bf16.mxu0 %v400
    %450 = vmatpush1.bf16.msra.mxu0 %v397
    %451 = vmatprep.subr.bf16.mxu0 %v375
    %452 = vmatpush1.bf16.msra.mxu0 %v374
    %453 = vmatprep.subr.bf16.mxu0 %v371
    %454 = vmatpush1.bf16.msra.mxu0 %v370
    %455 = vmatprep.subr.bf16.mxu0 %v367
    %456 = vmatpush1.bf16.msra.mxu0 %v366
    %457 = vmatprep.subr.bf16.mxu0 %v363
    %458 = vmatpush1.bf16.msra.mxu0 %v362
    %459 = vmatprep.subr.bf16.mxu0 0
    %460 = vmatpush2.bf16.msra.mxu0 0
    %461 = vmatprep.subr.bf16.mxu0 0
    %462 = vmatpush2.bf16.msra.mxu0 0
    %463 = vmatprep.subr.bf16.mxu0 0
    %464 = vmatpush2.bf16.msra.mxu0 0
    %465 = vmatprep.subr.bf16.mxu0 0
    %466 = vmatpush2.bf16.msra.mxu0 0
    %467 = vmatprep.subr.bf16.mxu0 0
    %468 = vmatpush2.bf16.msra.mxu0 0
    %469 = vmatprep.subr.bf16.mxu0 0
    %470 = vmatpush2.bf16.msra.mxu0 0
    %471 = vmatprep.subr.bf16.mxu0 0
    %472 = vmatpush2.bf16.msra.mxu0 0
    %473 = vmatprep.subr.bf16.mxu0 0
    %474 = vmatpush2.bf16.msra.mxu0 0
    %475 = vmatprep.mubr.bf16.mxu0 0
    %476 = vmatmul.mubr.bf16.gmra.mxu0 %v387
    %v477 = vpop.f32.mrf.mxu0
    %v478 = vadd.f32 %v383, %v477
    %v479 = vpop.f32.mrf.mxu0
    %v480 = vadd.f32 %v383, %v479
    %v481 = vpop.f32.mrf.mxu0
    %v482 = vpop.f32.mrf.mxu0
    %483 = vdwg.mxu0
    %vm484 = vcmp.ge.f32.partialorder %v437, 0.0
    %vm485 = vcmp.ge.f32.partialorder %v439, 0.0
    %vm486 = vcmp.ge.f32.partialorder %v478, 0.0
    %vm487 = vcmp.ge.f32.partialorder %v480, 0.0
    %v488 = vmul.f32 %v437, 0.2
    %v489 = vmul.f32 %v439, 0.2
    %v490 = vmul.f32 %v478, 0.2
    %v491 = vmul.f32 %v480, 0.2
    %v492 = vsel %vm484, %v437, %v488
    %v493 = vsel %vm485, %v439, %v489
    %v494 = vsel %vm486, %v478, %v490
    %v495 = vsel %vm487, %v480, %v491
    %496 = vset.pattern.permute.xlu0 73
    %497 = vperm.xlu0 %496, %v322
    %v498 = vpop.permute.xlu0 %497
    %v500 = vmul.f32 %v492, %v498
    %v501 = vmul.f32 %v493, %v498
    %v502 = vmul.f32 %v494, %v498
    %v503 = vmul.f32 %v495, %v498
    %v504 = vsel %vm389, %v500, 0.0
    %v505 = vrot.slane %v504, 4
    %v506 = vadd.f32 %v504, %v505
    %v507 = vrot.slane %v506, 2
    %v508 = vadd.f32 %v506, %v507
    %v509 = vrot.slane %v508, 1
    %v510 = vadd.f32 %v508, %v509
    %v511 = vsel %vm389, %v501, 0.0
    %v512 = vrot.slane %v511, 4
    %v513 = vadd.f32 %v511, %v512
    %v514 = vrot.slane %v513, 2
    %v515 = vadd.f32 %v513, %v514
    %v516 = vrot.slane %v515, 1
    %v517 = vadd.f32 %v515, %v516
    %v518 = vsel %vm389, %v502, 0.0
    %v519 = vrot.slane %v518, 4
    %v520 = vadd.f32 %v518, %v519
    %v521 = vrot.slane %v520, 2
    %v522 = vadd.f32 %v520, %v521
    %v523 = vrot.slane %v522, 1
    %v524 = vadd.f32 %v522, %v523
    %v525 = vsel %vm389, %v503, 0.0
    %v526 = vrot.slane %v525, 4
    %v527 = vadd.f32 %v525, %v526
    %v528 = vrot.slane %v527, 2
    %v529 = vadd.f32 %v527, %v528
    %v530 = vrot.slane %v529, 1
    %v531 = vadd.f32 %v529, %v530
    %v532 = vld [vmem:[#allocation6] sm:$0x1]
    %534 = vset.pattern.permute.xlu0 74
    %535 = vperm.xlu0 %534, %v532
    %v536 = vpop.permute.xlu0 %535
    %v538 = vadd.f32 %v510, %v536
    %v539 = vadd.f32 %v517, %v536
    %v540 = vadd.f32 %v524, %v536
    %v541 = vadd.f32 %v531, %v536
    %v542 = vmax.f32 %v538, 0.0
    %v543 = vmax.f32 %v539, 0.0
    %v544 = vmax.f32 %v540, 0.0
    %v545 = vmax.f32 %v541, 0.0
    %v550 = vcombine.low %v542, %v543
    %v551 = vcombine.low %v544, %v545
    %v553 = vunpack.c.l.s4 1966171168
    %v554 = vunpack.c.0.s8 %v553
    %v555 = vlaneseq
    %v556 = vshrl.u32 %v555, 7
    %v557 = vsub.s32 %v554, %v556
    %v558 = vrot.slane %v550, %v557
    %v560 = vunpack.c.l.s4 1966171168
    %v561 = vunpack.c.0.s8 %v560
    %v562 = vlaneseq
    %v563 = vshrl.u32 %v562, 7
    %v564 = vsub.s32 %v561, %v563
    %v565 = vrot.slane %v551, %v564
    %v566 = vcombine.low %v558, %v565
    %v568 = vunpack.c.l.s4 1966171168
    %v569 = vunpack.c.0.s8 %v568
    %v570 = vlaneseq
    %v571 = vshrl.u32 %v570, 7
    %v572 = vsub.s32 %v569, %v571
    %v573 = vrot.slane %v566, %v572
    %v575 = vlaneseq
    %vm576 = vcmp.ge.s32.totalorder %v575, 0
    %vm577 = vcmp.lt.s32.totalorder %v575, 512
    %vm578 = vmand %vm576, %vm577
    %579 = vst.msk [vmem:[#allocation8] sm:$0xf] %vm578, %v573
    // Predicated region
    $region18: #{tpu_custom_call.1} parent=1 // pred_check
      _
    $region19: #{tpu_custom_call.1} parent=1 // pred_check_branch
      %581 = sbr.rel (0) target = $region21
    $region20: #{tpu_custom_call.1} parent=1 // pred_region
      %s583 = ssub.s32 64, 64
      %584 = vsyncadd [#allocation5], %s583
      %s586 = sshll.u32 [#allocation8], 4
      %s587 = int_to_ptr.vmem [resolvable:$true] %s586
      %589 = dma.vmem_to_hbm [thread:$0]  %s587, 64, %s2, [#allocation5]
    $region21: #{tpu_custom_call.1} parent=1 // pred_fallthru
      _
    // Predicated region
    $region22: #{tpu_custom_call.1} parent=1 // pred_check
      _
    $region23: #{tpu_custom_call.1} parent=1 // pred_check_branch
      %591 = sbr.rel (0) target = $region25
    $region24: #{tpu_custom_call.1} parent=1 // pred_region
      %592 = dma.done [#allocation5], 64
    $region25: #{tpu_custom_call.1} parent=1 // pred_fallthru
      _
    %593 = vsyncpa [#allocation4], 1
    %594 = vsyncpa [#allocation7], 1
    %595 = vsyncpa [#allocation5], 1

</llo_original>
